<compile_context>
chip_gen: v7x
topology: tpu7x:2x2x1
jax: 0.10.0
libtpu: 0.0.40
codegen_flags: <defaults>
</compile_context>

<pallas_src>
import math
import functools

import jax
import jax.numpy as jnp
from jax.experimental import pallas as pl
from jax.experimental.pallas import tpu as pltpu


def _round_up(x, m):
    return ((x + m - 1) // m) * m


def _vmem_caps():
    """(tile_budget_bytes, vmem_limit_bytes), generation-aware with fallback."""
    cap = None
    try:
        info = pltpu.get_tpu_info()
        for attr in ("vmem_capacity_bytes", "vmem_size_bytes"):
            v = getattr(info, attr, None)
            if v:
                cap = int(v)
                break
    except Exception:
        cap = None
    if not cap or cap <= 0:
        cap = 64 * 1024 * 1024                      # conservative: v7x per-core VMEM
    budget = int(cap * 0.70)                        # tile working-set budget
    limit = min(int(cap * 0.90), 127 * 1024 * 1024) # scoped-VMEM ceiling for Mosaic
    return budget, limit


def _pick_tn(N, K, in_bytes, out_bytes, tb, budget):
    """Largest lane-aligned bank tile width that fits the VMEM budget."""
    n128 = _round_up(N, 128)
    for cand in (4096, 2048, 1024, 512, 256, 128):
        if cand > n128:
            continue
        working = (3 * K * cand * in_bytes        # bank tile, up to 3-deep buffered
                   + 2 * tb * K * in_bytes        # x tile, double-buffered
                   + 2 * tb * cand * out_bytes)   # out tile, double-buffered
        pad_waste = _round_up(N, cand) - n128
        if working <= budget and pad_waste * 8 <= n128:
            return cand
    # TODO(synk): for K so large that even a (K, 128) bank tile blows the VMEM
    # budget, add a third "arbitrary" K grid axis with a f32 VMEM accumulator.
    return 128


def _bank_block_spec(K, tn, buffers):
    index_map = lambda j, i: (0, j)   # only the OUTER (N) axis moves the bank tile
    if buffers and buffers > 2:
        try:
            return pl.BlockSpec((K, tn), index_map, pipeline_mode=pl.Buffered(buffers))
        except TypeError:
            pass
    return pl.BlockSpec((K, tn), index_map)


def _linear_average_kernel(x_ref, memT_ref, o_ref, *, inv_T):
    # (tb, K) @ (K, tn) -> (tb, tn) on the MXU, f32 accumulation.
    out = jax.lax.dot_general(
        x_ref[...], memT_ref[...],
        dimension_numbers=(((1,), (0,)), ((), ())),
        preferred_element_type=jnp.float32,
    )
    # The 1/T scale rides on the VPU under MXU / DMA slack.
    o_ref[...] = (out * inv_T).astype(o_ref.dtype)


def linear_average_forward(x, memory_T, n_valid, T, *, tn,
                           out_dtype=jnp.float32, bank_buffers=3,
                           vmem_limit_bytes=None):
    """out = (x @ memory.T) / T with the bank pre-transposed+padded as (K, N_pad)."""
    B, K = x.shape
    K2, N_pad = memory_T.shape
    assert K == K2, "inputSize mismatch between x and memory"
    assert N_pad % tn == 0, "bank must be pre-padded to a multiple of tn"

    # NOTE: inv_T is baked in as a static Python float; runtime edits to a
    # `params` buffer are not visible to the compiled kernel (T is static here).
    x = x.astype(memory_T.dtype)
    in_bytes = jnp.dtype(memory_T.dtype).itemsize
    out_bytes = jnp.dtype(out_dtype).itemsize

    if vmem_limit_bytes is None:
        _, vmem_limit_bytes = _vmem_caps()

    # Rows: keep the whole batch in one tile when it fits a 256-row MXU pass.
    tb = min(_round_up(B, 8), 256)
    B_pad = _round_up(B, tb)
    x_p = x if B_pad == B else jnp.pad(x, ((0, B_pad - B), (0, 0)))

    n_tiles = N_pad // tn
    b_tiles = B_pad // tb
    grid = (n_tiles, b_tiles)   # bank axis OUTER: each bank tile is DMA'd once
    buffers = bank_buffers if n_tiles > 2 else 2

    kernel = functools.partial(_linear_average_kernel, inv_T=float(1.0 / T))

    out = pl.pallas_call(
        kernel,
        out_shape=jax.ShapeDtypeStruct((B_pad, N_pad), out_dtype),
        grid_spec=pltpu.PrefetchScalarGridSpec(
            num_scalar_prefetch=0,
            grid=grid,
            in_specs=[
                pl.BlockSpec((tb, K), lambda j, i: (i, 0)),   # x rows (tiny, re-fetched)
                _bank_block_spec(K, tn, buffers),             # bank columns (streamed once)
            ],
            out_specs=pl.BlockSpec((tb, tn), lambda j, i: (i, j)),
        ),
        compiler_params=pltpu.CompilerParams(
            dimension_semantics=("parallel", "parallel"),
            vmem_limit_bytes=int(vmem_limit_bytes),
        ),
        cost_estimate=pl.CostEstimate(
            flops=2 * B_pad * N_pad * K,
            transcendentals=0,
            # bank read once; x re-read once per outer (N) step; output written once.
            bytes_accessed=(in_bytes * K * N_pad
                            + in_bytes * n_tiles * B_pad * K
                            + out_bytes * B_pad * N_pad),
        ),
    )(x_p, memory_T)

    if B_pad != B or N_pad != n_valid:
        out = out[:B, :n_valid]
    return out


class LinearAverage:
    """JAX/Pallas port of the PyTorch LinearAverage module (forward only)."""

    def __init__(self, inputSize, outputSize, T=0.05, momentum=0.5, key=None,
                 bank_dtype=jnp.bfloat16, out_dtype=jnp.float32):
        # bank_dtype=jnp.bfloat16 (default) halves the HBM traffic of the
        # dominant (K, N) bank stream and is the MXU-native input dtype;
        # pass bank_dtype=jnp.float32 for exact PyTorch numerics.
        # TODO(synk): on v7x an fp8(e4m3) bank + per-row scale epilogue would
        # halve bank traffic again; not implemented here.
        self.T = float(T)
        self.momentum = float(momentum)
        self.nLem = outputSize
        self.inputSize = inputSize
        self.out_dtype = out_dtype
        self.params = jnp.array([T, momentum], dtype=jnp.float32)

        # memory buffer: uniform in [-stdv, stdv), stdv = 1/sqrt(inputSize/3)
        stdv = 1.0 / math.sqrt(inputSize / 3)
        if key is None:
            key = jax.random.PRNGKey(0)
        mem_nk = jax.random.uniform(
            key, (outputSize, inputSize), dtype=jnp.float32,
            minval=-stdv, maxval=stdv)

        budget, self._vmem_limit = _vmem_caps()
        in_bytes = jnp.dtype(bank_dtype).itemsize
        out_bytes = jnp.dtype(out_dtype).itemsize
        self.tn = _pick_tn(outputSize, inputSize, in_bytes, out_bytes,
                           tb=256, budget=budget)

        # Only the padded, transposed, low-precision bank is kept resident:
        # no duplicate (N, K) f32 copy, no per-call pad/transpose in the hot path.
        n_pad = _round_up(outputSize, self.tn)
        mem_kn = mem_nk.T.astype(bank_dtype)
        if n_pad != outputSize:
            mem_kn = jnp.pad(mem_kn, ((0, 0), (0, n_pad - outputSize)))
        self.memory_T = jnp.asarray(mem_kn)          # (K, N_pad), bank_dtype

    @property
    def memory(self):
        """(N, K) float32 view of the bank (for reference / inspection only)."""
        return self.memory_T[:, :self.nLem].astype(jnp.float32).T

    def __call__(self, x, y):
        # y only feeds the backward-time memory momentum update (index_copy_).
        # TODO(synk): backward / memory update is a training side effect and is
        # not part of this forward kernel.
        del y
        return linear_average_forward(
            x, self.memory_T, self.nLem, self.T,
            tn=self.tn, out_dtype=self.out_dtype,
            vmem_limit_bytes=self._vmem_limit)


if __name__ == "__main__":
    key = jax.random.PRNGKey(0)
    k_mem, k_x, k_y = jax.random.split(key, 3)

    inputSize = 32     # feature dim (K)
    outputSize = 128   # number of memory entries (nLem / N)
    batch = 8

    mod = LinearAverage(inputSize, outputSize, T=0.05, momentum=0.5, key=k_mem)

    x = jax.random.normal(k_x, (batch, inputSize), dtype=jnp.float32)
    y = jax.random.randint(k_y, (batch,), 0, outputSize, dtype=jnp.int32)

    out = jax.block_until_ready(mod(x, y))

    # Reference in f32 computed from the exact (bf16) operands the kernel sees;
    # bf16*bf16 products are exact in f32, so tolerances stay tight.
    x_q = x.astype(mod.memory_T.dtype).astype(jnp.float32)
    bank_f32 = mod.memory_T[:, :outputSize].astype(jnp.float32)   # (K, N)
    ref = (x_q @ bank_f32) * (1.0 / mod.T)

    assert out.shape == (batch, outputSize)
    assert out.dtype == jnp.float32
    assert jnp.allclose(out.astype(jnp.float32), ref, atol=1e-3, rtol=1e-3), \
        "mismatch vs reference"

    print("KERNEL_OK")
</pallas_src>

<mosaic_0001>
module attributes {stable_mosaic.version = 11 : i64} {
  func.func @_linear_average_kernel(%arg0: i32, %arg1: i32, %arg2: memref<8x32xbf16, #tpu.memory_space<vmem>>, %arg3: memref<32x128xbf16, #tpu.memory_space<vmem>>, %arg4: memref<8x128xf32, #tpu.memory_space<vmem>>) attributes {dimension_semantics = [#tpu.dimension_semantics<parallel>, #tpu.dimension_semantics<parallel>], iteration_bounds = array<i64: 1, 1>, scalar_prefetch = 0 : i64, scratch_operands = 0 : i64, tpu.core_type = #tpu.core_type<tc>, window_params = [{transform_indices = @transform_0, window_bounds = array<i64: 8, 32>}, {transform_indices = @transform_1, window_bounds = array<i64: 32, 128>}, {transform_indices = @transform_2, window_bounds = array<i64: 8, 128>}]} {
    %c0 = arith.constant 0 : index
    %c0_0 = arith.constant 0 : index
    %0 = vector.load %arg2[%c0, %c0_0] : memref<8x32xbf16, #tpu.memory_space<vmem>>, vector<8x32xbf16>
    %c0_1 = arith.constant 0 : index
    %c0_2 = arith.constant 0 : index
    %1 = vector.load %arg3[%c0_1, %c0_2] : memref<32x128xbf16, #tpu.memory_space<vmem>>, vector<32x128xbf16>
    %cst = arith.constant dense<0.000000e+00> : vector<8x128xf32>
    %2 = tpu.matmul %0, %1, %cst {dimension_numbers = #tpu.dot_dimension_numbers<[1], [0], [0], [1], [0, 0, 1, 1], [], []>} : vector<8x32xbf16>, vector<32x128xbf16>, vector<8x128xf32> -> vector<8x128xf32>
    %cst_3 = arith.constant 2.000000e+01 : f32
    %3 = vector.broadcast %cst_3 : f32 to vector<8x128xf32>
    %4 = arith.mulf %2, %3 : vector<8x128xf32>
    %c0_4 = arith.constant 0 : index
    %c0_5 = arith.constant 0 : index
    %5 = vector.load %arg4[%c0_4, %c0_5] : memref<8x128xf32, #tpu.memory_space<vmem>>, vector<8x128xf32>
    tpu.vector_store %arg4[%c0_4, %c0_5], %4 {strides = array<i32>} : memref<8x128xf32, #tpu.memory_space<vmem>>, vector<8x128xf32>,
    return
  }
  func.func @transform_0(%arg0: i32, %arg1: i32) -> (i32, i32) {
    %c0_i32 = arith.constant 0 : i32
    %c0_i32_0 = arith.constant 0 : i32
    return %arg1, %c0_i32 : i32, i32
  }
  func.func @transform_1(%arg0: i32, %arg1: i32) -> (i32, i32) {
    %c0_i32 = arith.constant 0 : i32
    %c0_i32_0 = arith.constant 0 : i32
    return %c0_i32, %arg0 : i32, i32
  }
  func.func @transform_2(%arg0: i32, %arg1: i32) -> (i32, i32) {
    %c0_i32 = arith.constant 0 : i32
    return %arg1, %arg0 : i32, i32
  }
}

</mosaic_0001>

<llo_original>
// kernel: tpu_custom_call.1
$region0: #{tpu_custom_call.1}
  #allocation0 [shape = 'u32[]', space=smem, size = 0x4, offset = 0x4, fixed_abs, tag = 'smem constant byte address 0x4 - core index']
  #allocation1 [shape = 'u32[144,128]{1,0:T(1,128)}', space=vmem, size = 0x12000, scoped, tag = 'internal scratch']
  %s0 = inlined_call_operand.hbm [shape: bf16[8,32], index: 0, kind: input, shape index: {}]
  %s1 = inlined_call_operand.hbm [shape: bf16[32,128], index: 1, kind: input, shape index: {}]
  %s2 = inlined_call_operand.hbm [shape: f32[8,128], index: 2, kind: output, shape index: {}]
  %s3 = sld [smem:[#allocation0]]
  $region26: #{tpu_custom_call.1} parent=0
    _
  %s5 = ssub.s32 1, %s3
  %s6 = scalar_select 0, %s5, %s3
  $region1: #{tpu_custom_call.1} parent=0
    #allocation2 [shape = 'u8[2048]{0}', space=vmem, size = 0x800, scoped, tag = 'input window, operand 0, single buffered']
    #allocation3 [shape = 's32[1]{0}', space=sflag, size = 0x4, scoped, tag = 'scoped memory for tpu_custom_call.1']
    #allocation4 [shape = 's32[1]{0}', space=sflag, size = 0x4, scoped, tag = 'scoped memory for tpu_custom_call.1']
    #allocation5 [shape = 'u8[8192]{0}', space=vmem, size = 0x2000, scoped, tag = 'input window, operand 1, single buffered']
    #allocation6 [shape = 's32[1]{0}', space=sflag, size = 0x4, scoped, tag = 'scoped memory for tpu_custom_call.1']
    #allocation7 [shape = 'u8[4096]{0}', space=vmem, size = 0x1000, scoped, tag = 'output window, operand 0, single buffered']
    %7 = vsyncpa [#allocation3], 0
    %8 = vsyncpa [#allocation6], 0
    %9 = vsyncpa [#allocation4], 0
    // Predicated region
    $region2: #{tpu_custom_call.1} parent=1 // pred_check
      _
    $region3: #{tpu_custom_call.1} parent=1 // pred_check_branch
      %11 = sbr.rel (0) target = $region5
    $region4: #{tpu_custom_call.1} parent=1 // pred_region
      %s13 = ssub.s32 64, 64
      %14 = vsyncadd [#allocation3], %s13
      %s16 = sshll.u32 [#allocation2], 4
      %s17 = int_to_ptr.vmem [resolvable:$true] %s16
      %19 = dma.hbm_to_vmem [thread:$0]  %s0, 64, %s17, [#allocation3]
    $region5: #{tpu_custom_call.1} parent=1 // pred_fallthru
      _
    // Predicated region
    $region6: #{tpu_custom_call.1} parent=1 // pred_check
      _
    $region7: #{tpu_custom_call.1} parent=1 // pred_check_branch
      %21 = sbr.rel (0) target = $region9
    $region8: #{tpu_custom_call.1} parent=1 // pred_region
      %s23 = ssub.s32 256, 256
      %24 = vsyncadd [#allocation6], %s23
      %s25 = sshll.u32 [#allocation5], 4
      %s26 = int_to_ptr.vmem [resolvable:$true] %s25
      %31 = dma.hbm_to_vmem [thread:$0]  %s1, 256, %s26, [#allocation6], 64, 64, 4
    $region9: #{tpu_custom_call.1} parent=1 // pred_fallthru
      _
    // Predicated region
    $region10: #{tpu_custom_call.1} parent=1 // pred_check
      _
    $region11: #{tpu_custom_call.1} parent=1 // pred_check_branch
      %33 = sbr.rel (0) target = $region13
    $region12: #{tpu_custom_call.1} parent=1 // pred_region
      %34 = dma.done [#allocation3], 64
    $region13: #{tpu_custom_call.1} parent=1 // pred_fallthru
      _
    // Predicated region
    $region14: #{tpu_custom_call.1} parent=1 // pred_check
      _
    $region15: #{tpu_custom_call.1} parent=1 // pred_check_branch
      %36 = sbr.rel (0) target = $region17
    $region16: #{tpu_custom_call.1} parent=1 // pred_region
      %37 = dma.done [#allocation6], 256
    $region17: #{tpu_custom_call.1} parent=1 // pred_fallthru
      _
    %v39 = vld [vmem:[#allocation2] sm:$0xf]
    %v40 = vld [vmem:[#allocation5] sm:$0xf]
    %v41 = vld [vmem:[#allocation5 + $0x4] sm:$0xf]
    %v42 = vld [vmem:[#allocation5 + $0x8] sm:$0xf]
    %v43 = vld [vmem:[#allocation5 + $0xc] sm:$0xf]
    %v48 = vunpack.c.l.b16 %v40
    %v49 = vunpack.c.l.b16 %v41
    %v50 = vunpack.c.l.b16 %v42
    %v51 = vunpack.c.l.b16 %v43
    %v52 = vpack.c.b16 %v49, %v48
    %v53 = vpack.c.b16 %v51, %v50
    %vm56 = vcmask 261120
    %v58 = vsel %vm56, %v39, 0
    %60 = vmatprep.subr.bf16.mxu0 0
    %61 = vmatpush1.bf16.msra.mxu0 %v52
    %62 = vmatprep.subr.bf16.mxu0 0
    %63 = vmatpush1.bf16.msra.mxu0 %v53
    %64 = vmatprep.subr.bf16.mxu0 0
    %65 = vmatpush1.bf16.msra.mxu0 0
    %66 = vmatprep.subr.bf16.mxu0 0
    %67 = vmatpush1.bf16.msra.mxu0 0
    %68 = vmatprep.subr.bf16.mxu0 0
    %69 = vmatpush1.bf16.msra.mxu0 0
    %70 = vmatprep.subr.bf16.mxu0 0
    %71 = vmatpush1.bf16.msra.mxu0 0
    %72 = vmatprep.subr.bf16.mxu0 0
    %73 = vmatpush1.bf16.msra.mxu0 0
    %74 = vmatprep.subr.bf16.mxu0 0
    %75 = vmatpush1.bf16.msra.mxu0 0
    %76 = vmatprep.subr.bf16.mxu0 0
    %77 = vmatpush1.bf16.msra.mxu0 0
    %78 = vmatprep.subr.bf16.mxu0 0
    %79 = vmatpush1.bf16.msra.mxu0 0
    %80 = vmatprep.subr.bf16.mxu0 0
    %81 = vmatpush1.bf16.msra.mxu0 0
    %82 = vmatprep.subr.bf16.mxu0 0
    %83 = vmatpush1.bf16.msra.mxu0 0
    %84 = vmatprep.subr.bf16.mxu0 0
    %85 = vmatpush1.bf16.msra.mxu0 0
    %86 = vmatprep.subr.bf16.mxu0 0
    %87 = vmatpush1.bf16.msra.mxu0 0
    %88 = vmatprep.subr.bf16.mxu0 0
    %89 = vmatpush1.bf16.msra.mxu0 0
    %90 = vmatprep.subr.bf16.mxu0 0
    %91 = vmatpush1.bf16.msra.mxu0 0
    %92 = vmatprep.mubr.bf16.mxu0 0
    %93 = vmatmul.mubr.bf16.gmra.mrb[0].mxu0 %v58
    %v94 = vpop.f32.mrb[0].mxu0
    %v95 = vadd.f32 0.0, %v94
    %v96 = vpop.f32.mrb[0].mxu0
    %v97 = vpop.f32.mrb[0].mxu0
    %v98 = vpop.f32.mrb[0].mxu0
    %99 = vdwg.mxu0
    %v100 = vmul.f32 %v95, 20.0
    %101 = vst [vmem:[#allocation7] sm:$0xff] %v100
    // Predicated region
    $region18: #{tpu_custom_call.1} parent=1 // pred_check
      _
    $region19: #{tpu_custom_call.1} parent=1 // pred_check_branch
      %103 = sbr.rel (0) target = $region21
    $region20: #{tpu_custom_call.1} parent=1 // pred_region
      %s105 = ssub.s32 128, 128
      %106 = vsyncadd [#allocation4], %s105
      %s108 = sshll.u32 [#allocation7], 4
      %s109 = int_to_ptr.vmem [resolvable:$true] %s108
      %111 = dma.vmem_to_hbm [thread:$0]  %s109, 128, %s2, [#allocation4]
    $region21: #{tpu_custom_call.1} parent=1 // pred_fallthru
      _
    // Predicated region
    $region22: #{tpu_custom_call.1} parent=1 // pred_check
      _
    $region23: #{tpu_custom_call.1} parent=1 // pred_check_branch
      %113 = sbr.rel (0) target = $region25
    $region24: #{tpu_custom_call.1} parent=1 // pred_region
      %114 = dma.done [#allocation4], 128
    $region25: #{tpu_custom_call.1} parent=1 // pred_fallthru
      _
    %115 = vsyncpa [#allocation3], 1
    %116 = vsyncpa [#allocation6], 1
    %117 = vsyncpa [#allocation4], 1

</llo_original>
